<compile_context>
chip_gen: v5e
topology: v5e:2x2
jax: 0.10.0
libtpu: 0.0.40
codegen_flags: <defaults>
</compile_context>

<pallas_src>
import jax
import jax.numpy as jnp
from jax import lax
from jax.experimental import pallas as pl
from jax.experimental.pallas import tpu as pltpu


def mlp_kernel(x_ref, w1_ref, b1_ref, w2_ref, b2_ref, w3r_ref, pw_ref, b3_ref, o_ref):
    # x_ref: (tb, D); weights lane-padded to 128; biases f32; pw/b3 SMEM scalars.
    x = x_ref[...].astype(w1_ref.dtype)           # in-kernel operand cast (no-op for f32)

    # fc1 + ReLU (f32 accumulation on the MXU).
    a1 = jnp.dot(x, w1_ref[...], preferred_element_type=jnp.float32) + b1_ref[...]
    h1 = jnp.maximum(a1, 0.0)

    # Dropout(0.2): eval-mode identity.

    # fc2 + PReLU (single shared parameter, read from SMEM).
    a2 = jnp.dot(h1.astype(w2_ref.dtype), w2_ref[...],
                 preferred_element_type=jnp.float32) + b2_ref[...]
    pw = pw_ref[0, 0]
    h2 = jnp.where(a2 > 0.0, a2, pw * a2)

    # out layer (100 -> 1), lane-dense: y[0, i] = sum_k w3[k] * h2[i, k].
    # NT contraction on the last dims of both operands (flash-attention q@k^T
    # pattern) -> MXU handles the transpose on push; no (tb,128) vxpose of h2.
    y_row = lax.dot_general(w3r_ref[...], h2.astype(w3r_ref.dtype),
                            (((1,), (1,)), ((), ())),
                            preferred_element_type=jnp.float32)       # (1, tb)
    o_ref[...] = (y_row + b3_ref[0, 0]).astype(o_ref.dtype)


def _round_up(n, m):
    return pl.cdiv(n, m) * m


def _pad2d(a, rows, cols):
    return jnp.pad(a, ((0, rows - a.shape[0]), (0, cols - a.shape[1])))


def prepare_params(params, *, operand_dtype=jnp.float32):
    """One-time weight prep: pad feature dims to 128 lanes, transpose the final
    layer into a (1, H2p) row, reshape scalars for SMEM.  Exact through
    Linear/ReLU/PReLU since the padded columns stay identically zero."""
    w1, b1 = params["w1"], params["b1"]          # (D, 50),   (1, 50)
    w2, b2 = params["w2"], params["b2"]          # (50, 100), (1, 100)
    w3, b3 = params["w3"], params["b3"]          # (100, 1),  (1, 1)
    pw = params["prelu_w"]                       # (1, 1)

    D = w1.shape[0]
    H1p = _round_up(w1.shape[1], 128)
    H2p = _round_up(w2.shape[1], 128)
    return dict(
        w1=_pad2d(w1, D, H1p).astype(operand_dtype),
        b1=_pad2d(b1, 1, H1p).astype(jnp.float32),
        w2=_pad2d(w2, H1p, H2p).astype(operand_dtype),
        b2=_pad2d(b2, 1, H2p).astype(jnp.float32),
        w3r=_pad2d(w3.T, 1, H2p).astype(operand_dtype),
        prelu_w=pw.reshape(1, 1).astype(jnp.float32),
        b3=b3.reshape(1, 1).astype(jnp.float32),
    )


def _choose_tb(B, D, x_itemsize, *, target=4096, vmem_budget_bytes=24 << 20):
    """Batch tile: multiple of 128, as large as the VMEM budget allows, capped
    so the grid keeps >= 4 steps (v7x has 2 TensorCores sharding the
    'parallel' batch axis)."""
    # Per-row VMEM: double-buffered x tile + ~5 live (.,128) f32 intermediates
    # + double-buffered (1,.) f32 output block.
    per_row = 2 * D * x_itemsize + 5 * 128 * 4 + 2 * 4
    weight_overhead = 1 << 20          # padded weight/bias buffers + slack
    tb_fit = max(128, (vmem_budget_bytes - weight_overhead) // per_row)
    tb = min(target, tb_fit)
    if B > 4 * 128:
        tb = min(tb, _round_up(pl.cdiv(B, 4), 128))   # keep >= 4 grid steps
    else:
        tb = min(tb, _round_up(B, 128))
    return max(128, (tb // 128) * 128)


def reg_model_forward(x, prepped, *, tb_target=4096):
    """x: (B, input_size). prepped: output of prepare_params. Returns (B, 1) f32."""
    B, D = x.shape
    w1p, b1p = prepped["w1"], prepped["b1"]
    w2p, b2p = prepped["w2"], prepped["b2"]
    w3r, pws, b3s = prepped["w3r"], prepped["prelu_w"], prepped["b3"]
    H1p, H2p = w1p.shape[1], w2p.shape[1]

    tb = _choose_tb(B, D, x.dtype.itemsize, target=tb_target)
    grid = pl.cdiv(B, tb)
    Bp = grid * tb                      # lane-dense output slab; tail sliced off below

    weight_bytes = sum(int(a.size) * a.dtype.itemsize
                       for a in (w1p, b1p, w2p, b2p, w3r, pws, b3s))
    cost = pl.CostEstimate(
        flops=2 * B * (D * H1p + H1p * H2p + H2p),
        transcendentals=0,
        bytes_accessed=B * D * x.dtype.itemsize + B * 4 + weight_bytes,
    )

    out = pl.pallas_call(
        mlp_kernel,
        out_shape=jax.ShapeDtypeStruct((1, Bp), jnp.float32),
        grid_spec=pltpu.PrefetchScalarGridSpec(
            num_scalar_prefetch=0,
            grid=(grid,),
            in_specs=[
                # x: streamed per batch tile; last (partial) block is clipped by
                # Pallas — no wrapper-side padding copy of x.
                pl.BlockSpec((tb, D), lambda i: (i, 0)),
                # weights/biases: constant-index full blocks (VMEM-resident,
                # not re-fetched across grid steps).
                pl.BlockSpec((D, H1p), lambda i: (0, 0)),
                pl.BlockSpec((1, H1p), lambda i: (0, 0)),
                pl.BlockSpec((H1p, H2p), lambda i: (0, 0)),
                pl.BlockSpec((1, H2p), lambda i: (0, 0)),
                pl.BlockSpec((1, H2p), lambda i: (0, 0)),
                pl.BlockSpec(memory_space=pltpu.MemorySpace.SMEM),   # PReLU weight
                pl.BlockSpec(memory_space=pltpu.MemorySpace.SMEM),   # out-layer bias
            ],
            out_specs=pl.BlockSpec((1, tb), lambda i: (0, i)),       # lane-dense slab
        ),
        compiler_params=pltpu.CompilerParams(
            dimension_semantics=("parallel",),
            vmem_limit_bytes=32 << 20,      # safe on v5e/v6e/v7x; ~25% headroom
        ),
        cost_estimate=cost,
    )(x, w1p, b1p, w2p, b2p, w3r, pws, b3s)

    return out[0, :B].reshape(B, 1)


def init_params(key, input_size):
    """Deterministic init mimicking PyTorch defaults (uniform +- 1/sqrt(fan_in))."""
    def linear_init(key, fan_in, fan_out):
        kw, kb = jax.random.split(key)
        bound = 1.0 / jnp.sqrt(fan_in)
        w = jax.random.uniform(kw, (fan_in, fan_out), jnp.float32, -bound, bound)
        b = jax.random.uniform(kb, (1, fan_out), jnp.float32, -bound, bound)
        return w, b

    k1, k2, k3 = jax.random.split(key, 3)
    w1, b1 = linear_init(k1, input_size, 50)
    w2, b2 = linear_init(k2, 50, 100)
    w3, b3 = linear_init(k3, 100, 1)
    prelu_w = jnp.full((1, 1), 0.25, jnp.float32)   # PyTorch PReLU default init
    return dict(w1=w1, b1=b1, w2=w2, b2=b2, prelu_w=prelu_w, w3=w3, b3=b3)


def reference_forward(x, p):
    a1 = x @ p["w1"] + p["b1"]
    h1 = jnp.maximum(a1, 0.0)
    a2 = h1 @ p["w2"] + p["b2"]
    h2 = jnp.where(a2 > 0, a2, p["prelu_w"] * a2)
    return h2 @ p["w3"] + p["b3"]


if __name__ == "__main__":
    key = jax.random.PRNGKey(0)
    kx, kp = jax.random.split(key)

    batch, input_size = 1000, 32     # exercises a 4-step grid + a clipped last x block
    x = jax.random.normal(kx, (batch, input_size), jnp.float32)
    params = init_params(kp, input_size)

    # f32-operand path (exact eval-mode semantics of the PyTorch module).
    prepped = prepare_params(params)
    y = reg_model_forward(x, prepped)
    jax.block_until_ready(y)
    y_ref = reference_forward(x, params)
    assert y.shape == (batch, 1)
    assert jnp.allclose(y, y_ref, atol=1e-3, rtol=1e-3), float(jnp.max(jnp.abs(y - y_ref)))

    # bf16 MXU-operand path (valid on v5e/v6e/v7x): weights cast once at prep
    # time, x cast in-kernel; f32 accumulation -> modest tolerance.
    prepped_bf16 = prepare_params(params, operand_dtype=jnp.bfloat16)
    y_bf = reg_model_forward(x, prepped_bf16)
    jax.block_until_ready(y_bf)
    assert jnp.allclose(y_bf, y_ref, atol=5e-2, rtol=5e-2)

    print("KERNEL_OK")
</pallas_src>

<mosaic_0001>
module attributes {stable_mosaic.version = 11 : i64} {
  func.func @mlp_kernel(%arg0: i32, %arg1: memref<256x32xf32, #tpu.memory_space<vmem>>, %arg2: memref<32x128xf32, #tpu.memory_space<vmem>>, %arg3: memref<1x128xf32, #tpu.memory_space<vmem>>, %arg4: memref<128x128xf32, #tpu.memory_space<vmem>>, %arg5: memref<1x128xf32, #tpu.memory_space<vmem>>, %arg6: memref<1x128xf32, #tpu.memory_space<vmem>>, %arg7: memref<1x1xf32, #tpu.memory_space<smem>>, %arg8: memref<1x1xf32, #tpu.memory_space<smem>>, %arg9: memref<1x256xf32, #tpu.memory_space<vmem>>) attributes {dimension_semantics = [#tpu.dimension_semantics<parallel>], iteration_bounds = array<i64: 4>, scalar_prefetch = 0 : i64, scratch_operands = 0 : i64, tpu.core_type = #tpu.core_type<tc>, window_params = [{transform_indices = @transform_0, window_bounds = array<i64: 256, 32>}, {pipeline_mode = #tpu.pipeline_mode<synchronous>, transform_indices = @transform_1, window_bounds = array<i64: 32, 128>}, {pipeline_mode = #tpu.pipeline_mode<synchronous>, transform_indices = @transform_2, window_bounds = array<i64: 1, 128>}, {pipeline_mode = #tpu.pipeline_mode<synchronous>, transform_indices = @transform_3, window_bounds = array<i64: 128, 128>}, {pipeline_mode = #tpu.pipeline_mode<synchronous>, transform_indices = @transform_4, window_bounds = array<i64: 1, 128>}, {pipeline_mode = #tpu.pipeline_mode<synchronous>, transform_indices = @transform_5, window_bounds = array<i64: 1, 128>}, {transform_indices = @transform_6, window_bounds = array<i64: 1, 1>}, {transform_indices = @transform_7, window_bounds = array<i64: 1, 1>}, {transform_indices = @transform_8, window_bounds = array<i64: 1, 256>}]} {
    %c0 = arith.constant 0 : index
    %c0_0 = arith.constant 0 : index
    %0 = vector.load %arg1[%c0, %c0_0] : memref<256x32xf32, #tpu.memory_space<vmem>>, vector<256x32xf32>
    %c0_1 = arith.constant 0 : index
    %c0_2 = arith.constant 0 : index
    %1 = vector.load %arg2[%c0_1, %c0_2] : memref<32x128xf32, #tpu.memory_space<vmem>>, vector<32x128xf32>
    %cst = arith.constant dense<0.000000e+00> : vector<256x128xf32>
    %2 = tpu.matmul %0, %1, %cst {dimension_numbers = #tpu.dot_dimension_numbers<[1], [0], [0], [1], [0, 0, 1, 1], [], []>} : vector<256x32xf32>, vector<32x128xf32>, vector<256x128xf32> -> vector<256x128xf32>
    %c0_3 = arith.constant 0 : index
    %c0_4 = arith.constant 0 : index
    %3 = vector.load %arg3[%c0_3, %c0_4] : memref<1x128xf32, #tpu.memory_space<vmem>>, vector<1x128xf32>
    %4 = vector.broadcast %3 : vector<1x128xf32> to vector<256x128xf32>
    %5 = arith.addf %2, %4 : vector<256x128xf32>
    %cst_5 = arith.constant 0.000000e+00 : f32
    %6 = vector.broadcast %cst_5 : f32 to vector<256x128xf32>
    %7 = arith.maximumf %5, %6 : vector<256x128xf32>
    %c0_6 = arith.constant 0 : index
    %c0_7 = arith.constant 0 : index
    %8 = vector.load %arg4[%c0_6, %c0_7] : memref<128x128xf32, #tpu.memory_space<vmem>>, vector<128x128xf32>
    %cst_8 = arith.constant dense<0.000000e+00> : vector<256x128xf32>
    %9 = tpu.matmul %7, %8, %cst_8 {dimension_numbers = #tpu.dot_dimension_numbers<[1], [0], [0], [1], [0, 0, 1, 1], [], []>} : vector<256x128xf32>, vector<128x128xf32>, vector<256x128xf32> -> vector<256x128xf32>
    %c0_9 = arith.constant 0 : index
    %c0_10 = arith.constant 0 : index
    %10 = vector.load %arg5[%c0_9, %c0_10] : memref<1x128xf32, #tpu.memory_space<vmem>>, vector<1x128xf32>
    %11 = vector.broadcast %10 : vector<1x128xf32> to vector<256x128xf32>
    %12 = arith.addf %9, %11 : vector<256x128xf32>
    %c0_11 = arith.constant 0 : index
    %c0_12 = arith.constant 0 : index
    %13 = memref.load %arg7[%c0_11, %c0_12] : memref<1x1xf32, #tpu.memory_space<smem>>
    %cst_13 = arith.constant 0.000000e+00 : f32
    %14 = vector.broadcast %cst_13 : f32 to vector<256x128xf32>
    %15 = arith.cmpf ogt, %12, %14 : vector<256x128xf32>
    %16 = vector.broadcast %13 : f32 to vector<256x128xf32>
    %17 = arith.mulf %16, %12 : vector<256x128xf32>
    %18 = arith.select %15, %12, %17 : vector<256x128xi1>, vector<256x128xf32>
    %c0_14 = arith.constant 0 : index
    %c0_15 = arith.constant 0 : index
    %19 = vector.load %arg6[%c0_14, %c0_15] : memref<1x128xf32, #tpu.memory_space<vmem>>, vector<1x128xf32>
    %cst_16 = arith.constant dense<0.000000e+00> : vector<1x256xf32>
    %20 = tpu.matmul %19, %18, %cst_16 {dimension_numbers = #tpu.dot_dimension_numbers<[1], [1], [0], [0], [0, 0, 1, 0], [], []>} : vector<1x128xf32>, vector<256x128xf32>, vector<1x256xf32> -> vector<1x256xf32>
    %c0_17 = arith.constant 0 : index
    %c0_18 = arith.constant 0 : index
    %21 = memref.load %arg8[%c0_17, %c0_18] : memref<1x1xf32, #tpu.memory_space<smem>>
    %22 = vector.broadcast %21 : f32 to vector<1x256xf32>
    %23 = arith.addf %20, %22 : vector<1x256xf32>
    %c0_19 = arith.constant 0 : index
    %c0_20 = arith.constant 0 : index
    %24 = vector.load %arg9[%c0_19, %c0_20] : memref<1x256xf32, #tpu.memory_space<vmem>>, vector<1x256xf32>
    tpu.vector_store %arg9[%c0_19, %c0_20], %23 {strides = array<i32>} : memref<1x256xf32, #tpu.memory_space<vmem>>, vector<1x256xf32>,
    return
  }
  func.func @transform_0(%arg0: i32) -> (i32, i32) {
    %c0_i32 = arith.constant 0 : i32
    %c0_i32_0 = arith.constant 0 : i32
    return %arg0, %c0_i32 : i32, i32
  }
  func.func @transform_1(%arg0: i32) -> (i32, i32) {
    %c0_i32 = arith.constant 0 : i32
    %c0_i32_0 = arith.constant 0 : i32
    %c0_i32_1 = arith.constant 0 : i32
    return %c0_i32, %c0_i32_0 : i32, i32
  }
  func.func @transform_2(%arg0: i32) -> (i32, i32) {
    %c0_i32 = arith.constant 0 : i32
    %c0_i32_0 = arith.constant 0 : i32
    %c0_i32_1 = arith.constant 0 : i32
    return %c0_i32, %c0_i32_0 : i32, i32
  }
  func.func @transform_3(%arg0: i32) -> (i32, i32) {
    %c0_i32 = arith.constant 0 : i32
    %c0_i32_0 = arith.constant 0 : i32
    %c0_i32_1 = arith.constant 0 : i32
    return %c0_i32, %c0_i32_0 : i32, i32
  }
  func.func @transform_4(%arg0: i32) -> (i32, i32) {
    %c0_i32 = arith.constant 0 : i32
    %c0_i32_0 = arith.constant 0 : i32
    %c0_i32_1 = arith.constant 0 : i32
    return %c0_i32, %c0_i32_0 : i32, i32
  }
  func.func @transform_5(%arg0: i32) -> (i32, i32) {
    %c0_i32 = arith.constant 0 : i32
    %c0_i32_0 = arith.constant 0 : i32
    %c0_i32_1 = arith.constant 0 : i32
    return %c0_i32, %c0_i32_0 : i32, i32
  }
  func.func @transform_6(%arg0: i32) -> (i32, i32) {
    %c0_i32 = arith.constant 0 : i32
    %c0_i32_0 = arith.constant 0 : i32
    %c0_i32_1 = arith.constant 0 : i32
    return %c0_i32, %c0_i32_0 : i32, i32
  }
  func.func @transform_7(%arg0: i32) -> (i32, i32) {
    %c0_i32 = arith.constant 0 : i32
    %c0_i32_0 = arith.constant 0 : i32
    %c0_i32_1 = arith.constant 0 : i32
    return %c0_i32, %c0_i32_0 : i32, i32
  }
  func.func @transform_8(%arg0: i32) -> (i32, i32) {
    %c0_i32 = arith.constant 0 : i32
    %c0_i32_0 = arith.constant 0 : i32
    return %c0_i32, %arg0 : i32, i32
  }
}

</mosaic_0001>

<llo_original>
// kernel: tpu_custom_call.1
$region0: #{tpu_custom_call.1}
  #allocation0 [shape = 'u32[]', space=smem, size = 0x4, offset = 0x4, fixed_abs, tag = 'smem constant byte address 0x4 - core index']
  #allocation1 [shape = 'u32[72,128]{1,0:T(1,128)}', space=vmem, size = 0x9000, scoped, tag = 'internal scratch']
  #allocation2 [shape = 'f32[1,1]{1,0:T(1,128)S(6)}', space=smem, size = 0x200, scoped, tag = 'scoped memory for tpu_custom_call.1']
  #allocation3 [shape = 'f32[1,1]{1,0:T(1,128)S(6)}', space=smem, size = 0x200, scoped, tag = 'scoped memory for tpu_custom_call.1']
  %s0 = inlined_call_operand.vmem [shape: f32[1000,32], index: 0, kind: input, shape index: {}]
  %s1 = inlined_call_operand.vmem [shape: f32[32,128], index: 1, kind: input, shape index: {}]
  %s2 = inlined_call_operand.vmem [shape: f32[1,128], index: 2, kind: input, shape index: {}]
  %s3 = inlined_call_operand.vmem [shape: f32[128,128], index: 3, kind: input, shape index: {}]
  %s4 = inlined_call_operand.vmem [shape: f32[1,128], index: 4, kind: input, shape index: {}]
  %s5 = inlined_call_operand.vmem [shape: f32[1,128], index: 5, kind: input, shape index: {}]
  %s6 = inlined_call_operand.<no memory space> [shape: f32[1,1], index: 6, kind: input, shape index: {}]
  %s7 = inlined_call_operand.<no memory space> [shape: f32[1,1], index: 7, kind: input, shape index: {}]
  %s8 = inlined_call_operand.hbm [shape: f32[1,1024], index: 8, kind: output, shape index: {}]
  %s9 = sld [smem:[#allocation0]]
  $region65: #{tpu_custom_call.1} parent=0
    _
  %s11 = ssub.s32 1, %s9
  %s12 = scalar_select 0, %s11, %s9
  %13 = sst [smem:[#allocation2]] %s6
  %14 = sst [smem:[#allocation3]] %s7
  $region1: #{tpu_custom_call.1} parent=0
    #allocation4 [shape = 'u8[2048]{0}', space=vmem, size = 0x800, scoped, tag = 'output window, operand 0']
    #allocation5 [shape = 's32[2]{0}', space=sflag, size = 0x8, scoped, tag = 'scoped memory for tpu_custom_call.1']
    %15 = vsyncpa [#allocation5], 0
    %s16 = scalar_lea.sflag [#allocation5], 1
    %17 = vsyncpa %s16, 0
    loop: start=0, step=1, limit=6
    $region2: #{tpu_custom_call.1} parent=1 // loop_pre_header
      _
    $region3: #{tpu_custom_call.1} parent=1 // loop_header
      %s19 = sphi 0, %s23
      %p20 = scmp.ge.s32.totalorder %s19, 6
      %s29 = sphi 0, %s31
      %s32 = sphi 0, %s29
      %s33 = sphi 0, %s32
      %s49 = sphi 0, %s33
      %s53 = sphi 0, %s53
      %s55 = sphi 0, %s53
      %s56 = sphi 0, %s55
      %s70 = sphi 0, %s56
      %s74 = sphi 0, %s74
      %s76 = sphi 0, %s74
      %s77 = sphi 0, %s76
      %s91 = sphi 0, %s77
      %s95 = sphi 0, %s95
      %s97 = sphi 0, %s95
      %s98 = sphi 0, %s97
      %s112 = sphi 0, %s98
      %s116 = sphi 0, %s116
      %s118 = sphi 0, %s116
      %s119 = sphi 0, %s118
      %s133 = sphi 0, %s119
      %s137 = sphi 0, %s137
      %s139 = sphi 0, %s137
      %s140 = sphi 0, %s139
      %s154 = sphi 0, %s140
      %s158 = sphi 0, %s158
      %s160 = sphi 0, %s158
      %s161 = sphi 0, %s160
      %s175 = sphi 0, %s161
      %s179 = sphi 0, %s179
      %s181 = sphi 0, %s179
      %s182 = sphi 0, %s181
      %s196 = sphi 0, %s182
      %s202 = sphi 0, %s204
      %s205 = sphi 0, %s202
      %s206 = sphi 0, %s205
      %s222 = sphi 0, %s206
    $region4: #{tpu_custom_call.1} parent=1 // loop_header_branch
      %22 = sbr.rel (%p20) target = $region8
    $region5: #{tpu_custom_call.1} parent=1 // loop_body
      %s24 = ssub.s32 %s19, 1
      %s25 = ssub.s32 %s19, 2
      %s26 = sadd.s32 %s19, 1
      %s27 = ssub.s32 %s19, %s26
      %p28 = scmp.eq.s32.totalorder %s27, 0
      %s30 = sadd.s32 %s29, 1
      %s31 = scalar_select %p28, %s29, %s30
      %p34 = pneg %p28
      %p35 = scmp.eq.s32.totalorder %s19, 3
      %p36 = por %p34, %p35
      %p37 = scmp.ne.s32.totalorder %s29, %s32
      %p38 = scmp.eq.s32.totalorder %s19, 0
      %p39 = por %p37, %p38
      %p40 = scmp.ne.s32.totalorder %s29, %s32
      %p41 = scmp.eq.s32.totalorder %s24, 3
      %p42 = por %p40, %p41
      %p43 = scmp.ne.s32.totalorder %s32, %s33
      %p44 = scmp.eq.s32.totalorder %s24, 0
      %p45 = por %p43, %p44
      %p46 = scmp.ne.s32.totalorder %s32, %s33
      %p47 = scmp.eq.s32.totalorder %s25, 3
      %p48 = por %p46, %p47
      %p50 = scmp.ne.s32.totalorder %s33, %s49
      %p51 = scmp.eq.s32.totalorder %s25, 0
      %p52 = por %p50, %p51
      %s54 = sadd.s32 %s53, 1
      %p57 = scmp.eq.s32.totalorder %s19, 3
      %p58 = scmp.ne.s32.totalorder %s53, %s55
      %p59 = scmp.eq.s32.totalorder %s19, 0
      %p60 = por %p58, %p59
      %p61 = scmp.ne.s32.totalorder %s53, %s55
      %p62 = scmp.eq.s32.totalorder %s24, 3
      %p63 = por %p61, %p62
      %p64 = scmp.ne.s32.totalorder %s55, %s56
      %p65 = scmp.eq.s32.totalorder %s24, 0
      %p66 = por %p64, %p65
      %p67 = scmp.ne.s32.totalorder %s55, %s56
      %p68 = scmp.eq.s32.totalorder %s25, 3
      %p69 = por %p67, %p68
      %p71 = scmp.ne.s32.totalorder %s56, %s70
      %p72 = scmp.eq.s32.totalorder %s25, 0
      %p73 = por %p71, %p72
      %s75 = sadd.s32 %s74, 1
      %p78 = scmp.eq.s32.totalorder %s19, 3
      %p79 = scmp.ne.s32.totalorder %s74, %s76
      %p80 = scmp.eq.s32.totalorder %s19, 0
      %p81 = por %p79, %p80
      %p82 = scmp.ne.s32.totalorder %s74, %s76
      %p83 = scmp.eq.s32.totalorder %s24, 3
      %p84 = por %p82, %p83
      %p85 = scmp.ne.s32.totalorder %s76, %s77
      %p86 = scmp.eq.s32.totalorder %s24, 0
      %p87 = por %p85, %p86
      %p88 = scmp.ne.s32.totalorder %s76, %s77
      %p89 = scmp.eq.s32.totalorder %s25, 3
      %p90 = por %p88, %p89
      %p92 = scmp.ne.s32.totalorder %s77, %s91
      %p93 = scmp.eq.s32.totalorder %s25, 0
      %p94 = por %p92, %p93
      %s96 = sadd.s32 %s95, 1
      %p99 = scmp.eq.s32.totalorder %s19, 3
      %p100 = scmp.ne.s32.totalorder %s95, %s97
      %p101 = scmp.eq.s32.totalorder %s19, 0
      %p102 = por %p100, %p101
      %p103 = scmp.ne.s32.totalorder %s95, %s97
      %p104 = scmp.eq.s32.totalorder %s24, 3
      %p105 = por %p103, %p104
      %p106 = scmp.ne.s32.totalorder %s97, %s98
      %p107 = scmp.eq.s32.totalorder %s24, 0
      %p108 = por %p106, %p107
      %p109 = scmp.ne.s32.totalorder %s97, %s98
      %p110 = scmp.eq.s32.totalorder %s25, 3
      %p111 = por %p109, %p110
      %p113 = scmp.ne.s32.totalorder %s98, %s112
      %p114 = scmp.eq.s32.totalorder %s25, 0
      %p115 = por %p113, %p114
      %s117 = sadd.s32 %s116, 1
      %p120 = scmp.eq.s32.totalorder %s19, 3
      %p121 = scmp.ne.s32.totalorder %s116, %s118
      %p122 = scmp.eq.s32.totalorder %s19, 0
      %p123 = por %p121, %p122
      %p124 = scmp.ne.s32.totalorder %s116, %s118
      %p125 = scmp.eq.s32.totalorder %s24, 3
      %p126 = por %p124, %p125
      %p127 = scmp.ne.s32.totalorder %s118, %s119
      %p128 = scmp.eq.s32.totalorder %s24, 0
      %p129 = por %p127, %p128
      %p130 = scmp.ne.s32.totalorder %s118, %s119
      %p131 = scmp.eq.s32.totalorder %s25, 3
      %p132 = por %p130, %p131
      %p134 = scmp.ne.s32.totalorder %s119, %s133
      %p135 = scmp.eq.s32.totalorder %s25, 0
      %p136 = por %p134, %p135
      %s138 = sadd.s32 %s137, 1
      %p141 = scmp.eq.s32.totalorder %s19, 3
      %p142 = scmp.ne.s32.totalorder %s137, %s139
      %p143 = scmp.eq.s32.totalorder %s19, 0
      %p144 = por %p142, %p143
      %p145 = scmp.ne.s32.totalorder %s137, %s139
      %p146 = scmp.eq.s32.totalorder %s24, 3
      %p147 = por %p145, %p146
      %p148 = scmp.ne.s32.totalorder %s139, %s140
      %p149 = scmp.eq.s32.totalorder %s24, 0
      %p150 = por %p148, %p149
      %p151 = scmp.ne.s32.totalorder %s139, %s140
      %p152 = scmp.eq.s32.totalorder %s25, 3
      %p153 = por %p151, %p152
      %p155 = scmp.ne.s32.totalorder %s140, %s154
      %p156 = scmp.eq.s32.totalorder %s25, 0
      %p157 = por %p155, %p156
      %s159 = sadd.s32 %s158, 1
      %p162 = scmp.eq.s32.totalorder %s19, 3
      %p163 = scmp.ne.s32.totalorder %s158, %s160
      %p164 = scmp.eq.s32.totalorder %s19, 0
      %p165 = por %p163, %p164
      %p166 = scmp.ne.s32.totalorder %s158, %s160
      %p167 = scmp.eq.s32.totalorder %s24, 3
      %p168 = por %p166, %p167
      %p169 = scmp.ne.s32.totalorder %s160, %s161
      %p170 = scmp.eq.s32.totalorder %s24, 0
      %p171 = por %p169, %p170
      %p172 = scmp.ne.s32.totalorder %s160, %s161
      %p173 = scmp.eq.s32.totalorder %s25, 3
      %p174 = por %p172, %p173
      %p176 = scmp.ne.s32.totalorder %s161, %s175
      %p177 = scmp.eq.s32.totalorder %s25, 0
      %p178 = por %p176, %p177
      %s180 = sadd.s32 %s179, 1
      %p183 = scmp.eq.s32.totalorder %s19, 3
      %p184 = scmp.ne.s32.totalorder %s179, %s181
      %p185 = scmp.eq.s32.totalorder %s19, 0
      %p186 = por %p184, %p185
      %p187 = scmp.ne.s32.totalorder %s179, %s181
      %p188 = scmp.eq.s32.totalorder %s24, 3
      %p189 = por %p187, %p188
      %p190 = scmp.ne.s32.totalorder %s181, %s182
      %p191 = scmp.eq.s32.totalorder %s24, 0
      %p192 = por %p190, %p191
      %p193 = scmp.ne.s32.totalorder %s181, %s182
      %p194 = scmp.eq.s32.totalorder %s25, 3
      %p195 = por %p193, %p194
      %p197 = scmp.ne.s32.totalorder %s182, %s196
      %p198 = scmp.eq.s32.totalorder %s25, 0
      %p199 = por %p197, %p198
      %s200 = ssub.s32 %s19, %s26
      %p201 = scmp.eq.s32.totalorder %s200, 0
      %s203 = sadd.s32 %s202, 1
      %s204 = scalar_select %p201, %s202, %s203
      %p207 = pneg %p201
      %p208 = scmp.eq.s32.totalorder %s19, 3
      %p209 = por %p207, %p208
      %p210 = scmp.ne.s32.totalorder %s202, %s205
      %p211 = scmp.eq.s32.totalorder %s19, 0
      %p212 = por %p210, %p211
      %p213 = scmp.ne.s32.totalorder %s202, %s205
      %p214 = scmp.eq.s32.totalorder %s24, 3
      %p215 = por %p213, %p214
      %p216 = scmp.ne.s32.totalorder %s205, %s206
      %p217 = scmp.eq.s32.totalorder %s24, 0
      %p218 = por %p216, %p217
      %p219 = scmp.ne.s32.totalorder %s205, %s206
      %p220 = scmp.eq.s32.totalorder %s25, 3
      %p221 = por %p219, %p220
      %p223 = scmp.ne.s32.totalorder %s206, %s222
      %p224 = scmp.eq.s32.totalorder %s25, 0
      %p225 = por %p223, %p224
      %p226 = scmp.le.s32.totalorder 1, %s19
      %p227 = scmp.lt.s32.totalorder %s19, 5
      %p228 = pnand %p226, %p227
      %p229 = pneg %p228
      // Predicated region
      $region9: #{tpu_custom_call.1} parent=5 // pred_check
        _
      $region10: #{tpu_custom_call.1} parent=5 // pred_check_branch
        %231 = sbr.rel (%p228) target = $region12
      $region11: #{tpu_custom_call.1} parent=5 // pred_region
        %s232 = ssub.s32 %s19, 1
        // Predicated region
        $region13: #{tpu_custom_call.1} parent=11 // pred_check
          %p233 = pneg %p66
        $region14: #{tpu_custom_call.1} parent=11 // pred_check_branch
          %235 = sbr.rel (%p233) target = $region16
        $region15: #{tpu_custom_call.1} parent=11 // pred_region
          _
        $region16: #{tpu_custom_call.1} parent=11 // pred_fallthru
          _
        // Predicated region
        $region17: #{tpu_custom_call.1} parent=11 // pred_check
          %p236 = pneg %p87
        $region18: #{tpu_custom_call.1} parent=11 // pred_check_branch
          %238 = sbr.rel (%p236) target = $region20
        $region19: #{tpu_custom_call.1} parent=11 // pred_region
          _
        $region20: #{tpu_custom_call.1} parent=11 // pred_fallthru
          _
        // Predicated region
        $region21: #{tpu_custom_call.1} parent=11 // pred_check
          %p239 = pneg %p108
        $region22: #{tpu_custom_call.1} parent=11 // pred_check_branch
          %241 = sbr.rel (%p239) target = $region24
        $region23: #{tpu_custom_call.1} parent=11 // pred_region
          _
        $region24: #{tpu_custom_call.1} parent=11 // pred_fallthru
          _
        // Predicated region
        $region25: #{tpu_custom_call.1} parent=11 // pred_check
          %p242 = pneg %p129
        $region26: #{tpu_custom_call.1} parent=11 // pred_check_branch
          %244 = sbr.rel (%p242) target = $region28
        $region27: #{tpu_custom_call.1} parent=11 // pred_region
          _
        $region28: #{tpu_custom_call.1} parent=11 // pred_fallthru
          _
        // Predicated region
        $region29: #{tpu_custom_call.1} parent=11 // pred_check
          %p245 = pneg %p150
        $region30: #{tpu_custom_call.1} parent=11 // pred_check_branch
          %247 = sbr.rel (%p245) target = $region32
        $region31: #{tpu_custom_call.1} parent=11 // pred_region
          _
        $region32: #{tpu_custom_call.1} parent=11 // pred_fallthru
          _
        // Predicated region
        $region33: #{tpu_custom_call.1} parent=11 // pred_check
          %p248 = pneg %p171
        $region34: #{tpu_custom_call.1} parent=11 // pred_check_branch
          %250 = sbr.rel (%p248) target = $region36
        $region35: #{tpu_custom_call.1} parent=11 // pred_region
          _
        $region36: #{tpu_custom_call.1} parent=11 // pred_fallthru
          _
        // Predicated region
        $region37: #{tpu_custom_call.1} parent=11 // pred_check
          %p251 = pneg %p192
        $region38: #{tpu_custom_call.1} parent=11 // pred_check_branch
          %253 = sbr.rel (%p251) target = $region40
        $region39: #{tpu_custom_call.1} parent=11 // pred_region
          _
        $region40: #{tpu_custom_call.1} parent=11 // pred_fallthru
          _
      $region12: #{tpu_custom_call.1} parent=5 // pred_fallthru
        _
      %p254 = scmp.lt.s32.totalorder %s19, 4
      // Predicated region
      $region41: #{tpu_custom_call.1} parent=5 // pred_check
        %p255 = pneg %p254
      $region42: #{tpu_custom_call.1} parent=5 // pred_check_branch
        %257 = sbr.rel (%p255) target = $region44
      $region43: #{tpu_custom_call.1} parent=5 // pred_region
        // Predicated region
        $region45: #{tpu_custom_call.1} parent=43 // pred_check
          %p258 = pneg %p39
        $region46: #{tpu_custom_call.1} parent=43 // pred_check_branch
          %260 = sbr.rel (%p258) target = $region48
        $region47: #{tpu_custom_call.1} parent=43 // pred_region
          %s261 = smul.u32 32, %s19
          %s262 = ssub.s32 125, %s261
          %p263 = scmp.lt.s32.totalorder %s262, 32
          %s264 = scalar_select %p263, %s262, 32
          %s265 = smul.u32 8, %s264
          %p266 = scmp.lt.s32.totalorder %s261, 124
          %s267 = scalar_select %p266, %s261, 124
          %s268 = smul.addr %s267, 8
          %s269 = scalar_lea.vmem %s0, %s268
          %s270 = smul.u32 32, %s19
          %s271 = ssub.s32 125, %s270
          %p272 = scmp.lt.s32.totalorder %s271, 32
          %s273 = scalar_select %p272, %s271, 32
          %s274 = smul.u32 8, %s273
        $region48: #{tpu_custom_call.1} parent=43 // pred_fallthru
          _
      $region44: #{tpu_custom_call.1} parent=5 // pred_fallthru
        _
      %p275 = scmp.le.s32.totalorder 1, %s19
      %p276 = scmp.lt.s32.totalorder %s19, 5
      %p277 = pnand %p275, %p276
      %p278 = pneg %p277
      // Predicated region
      $region49: #{tpu_custom_call.1} parent=5 // pred_check
        _
      $region50: #{tpu_custom_call.1} parent=5 // pred_check_branch
        %280 = sbr.rel (%p277) target = $region52
      $region51: #{tpu_custom_call.1} parent=5 // pred_region
        %s281 = ssub.s32 %s19, 1
        %s282 = smul.u32 32, %s24
        %s283 = ssub.s32 125, %s282
        %p284 = scmp.lt.s32.totalorder %s283, 32
        %s285 = scalar_select %p284, %s283, 32
        %s286 = smul.u32 8, %s285
        %p287 = scmp.lt.s32.totalorder %s282, 124
        %s288 = scalar_select %p287, %s282, 124
        %s289 = smul.addr %s288, 8
        %s290 = scalar_lea.vmem %s0, %s289
        %p291 = pneg %p45
        %p292 = pneg %p42
        %p293 = pneg %p66
        %p294 = pneg %p63
        %p295 = pneg %p87
        %p296 = pneg %p84
        %p297 = pneg %p108
        %p298 = pneg %p105
        %p299 = pneg %p129
        %p300 = pneg %p126
        %p301 = pneg %p150
        %p302 = pneg %p147
        %p303 = pneg %p171
        %p304 = pneg %p168
        %p305 = pneg %p192
        %p306 = pneg %p189
        %p307 = pneg %p218
        %p308 = pneg %p215
        %s309 = sand.u32 %s205, 1
        %s310 = scalar_lea.sflag [#allocation5], %s309
        %s311 = sand.u32 %s205, 1
        %s312 = smul.addr %s311, 2
        %s313 = scalar_lea.vmem [#allocation4], %s312
        %s314 = smul.u32 32, %s24
        %s315 = ssub.s32 125, %s314
        %p316 = scmp.lt.s32.totalorder %s315, 32
        %s317 = scalar_select %p316, %s315, 32
        %s318 = smul.u32 8, %s317
        %p319 = scmp.lt.s32.totalorder %s314, 124
        %s320 = scalar_select %p319, %s314, 124
        %s321 = smul.addr %s320, 8
        %s322 = scalar_lea.vmem %s0, %s321
        %s323 = smul.u32 32, %s24
        %s324 = ssub.s32 125, %s323
        %p325 = scmp.lt.s32.totalorder %s324, 32
        %s326 = scalar_select %p325, %s324, 32
        %s327 = smul.u32 8, %s326
        %s328 = smul.u32 2, %s24
        %v329 = vld [vmem:[%s322] sm:$0xff]
        %v330 = vld [vmem:[%s322 + $0x8] sm:$0xff]
        %v331 = vld [vmem:[%s322 + $0x10] sm:$0xff]
        %v332 = vld [vmem:[%s322 + $0x18] sm:$0xff]
        %v333 = vld [vmem:[%s322 + $0x20] sm:$0xff]
        %v334 = vld [vmem:[%s322 + $0x28] sm:$0xff]
        %v335 = vld [vmem:[%s322 + $0x30] sm:$0xff]
        %v336 = vld [vmem:[%s322 + $0x38] sm:$0xff]
        %v337 = vld [vmem:[%s322 + $0x40] sm:$0xff]
        %v338 = vld [vmem:[%s322 + $0x48] sm:$0xff]
        %v339 = vld [vmem:[%s322 + $0x50] sm:$0xff]
        %v340 = vld [vmem:[%s322 + $0x58] sm:$0xff]
        %v341 = vld [vmem:[%s322 + $0x60] sm:$0xff]
        %v342 = vld [vmem:[%s322 + $0x68] sm:$0xff]
        %v343 = vld [vmem:[%s322 + $0x70] sm:$0xff]
        %v344 = vld [vmem:[%s322 + $0x78] sm:$0xff]
        %v345 = vld [vmem:[%s322 + $0x80] sm:$0xff]
        %v346 = vld [vmem:[%s322 + $0x88] sm:$0xff]
        %v347 = vld [vmem:[%s322 + $0x90] sm:$0xff]
        %v348 = vld [vmem:[%s322 + $0x98] sm:$0xff]
        %v349 = vld [vmem:[%s322 + $0xa0] sm:$0xff]
        %v350 = vld [vmem:[%s322 + $0xa8] sm:$0xff]
        %v351 = vld [vmem:[%s322 + $0xb0] sm:$0xff]
        %v352 = vld [vmem:[%s322 + $0xb8] sm:$0xff]
        %v353 = vld [vmem:[%s322 + $0xc0] sm:$0xff]
        %v354 = vld [vmem:[%s322 + $0xc8] sm:$0xff]
        %v355 = vld [vmem:[%s322 + $0xd0] sm:$0xff]
        %v356 = vld [vmem:[%s322 + $0xd8] sm:$0xff]
        %v357 = vld [vmem:[%s322 + $0xe0] sm:$0xff]
        %v358 = vld [vmem:[%s322 + $0xe8] sm:$0xff]
        %v359 = vld [vmem:[%s322 + $0xf0] sm:$0xff]
        %v360 = vld [vmem:[%s322 + $0xf8] sm:$0xff]
        %v361 = vld [vmem:[%s1] sm:$0xff]
        %v362 = vld [vmem:[%s1 + $0x8] sm:$0xff]
        %v363 = vld [vmem:[%s1 + $0x10] sm:$0xff]
        %v364 = vld [vmem:[%s1 + $0x18] sm:$0xff]
        %v365 = vld [vmem:[%s2] sm:$0x1]
        %v367 = vperm.slane %v365, 0
        %vm369 = vcmask 261120
        %v371 = vsel %vm369, %v329, 0
        %v374 = vsel %vm369, %v330, 0
        %v377 = vsel %vm369, %v331, 0
        %v380 = vsel %vm369, %v332, 0
        %v383 = vsel %vm369, %v333, 0
        %v386 = vsel %vm369, %v334, 0
        %v389 = vsel %vm369, %v335, 0
        %v392 = vsel %vm369, %v336, 0
        %v395 = vsel %vm369, %v337, 0
        %v398 = vsel %vm369, %v338, 0
        %v401 = vsel %vm369, %v339, 0
        %v404 = vsel %vm369, %v340, 0
        %v407 = vsel %vm369, %v341, 0
        %v410 = vsel %vm369, %v342, 0
        %v413 = vsel %vm369, %v343, 0
        %v416 = vsel %vm369, %v344, 0
        %v419 = vsel %vm369, %v345, 0
        %v422 = vsel %vm369, %v346, 0
        %v425 = vsel %vm369, %v347, 0
        %v428 = vsel %vm369, %v348, 0
        %v431 = vsel %vm369, %v349, 0
        %v434 = vsel %vm369, %v350, 0
        %v437 = vsel %vm369, %v351, 0
        %v440 = vsel %vm369, %v352, 0
        %v443 = vsel %vm369, %v353, 0
        %v446 = vsel %vm369, %v354, 0
        %v449 = vsel %vm369, %v355, 0
        %v452 = vsel %vm369, %v356, 0
        %v455 = vsel %vm369, %v357, 0
        %v458 = vsel %vm369, %v358, 0
        %v461 = vsel %vm369, %v359, 0
        %v464 = vsel %vm369, %v360, 0
        %466 = vmatpush.msra.mxu0 0.0
        %467 = vmatpush.msra.mxu0 0.0
        %468 = vmatpush.msra.mxu0 0.0
        %469 = vmatpush.msra.mxu0 0.0
        %470 = vmatpush.msra.mxu0 0.0
        %471 = vmatpush.msra.mxu0 0.0
        %472 = vmatpush.msra.mxu0 0.0
        %473 = vmatpush.msra.mxu0 0.0
        %474 = vmatpush.msra.mxu0 0.0
        %475 = vmatpush.msra.mxu0 0.0
        %476 = vmatpush.msra.mxu0 0.0
        %477 = vmatpush.msra.mxu0 0.0
        %478 = vmatpush.msra.mxu0 %v364
        %479 = vmatpush.msra.mxu0 %v363
        %480 = vmatpush.msra.mxu0 %v362
        %481 = vmatpush.msra.mxu0 %v361
        %482 = vmatmul.f32.gmra.mxu0 %v371
        %v483 = vpop.f32.mrf.mxu0
        %v484 = vadd.f32 %v367, %v483
        %485 = vmatmul.f32.gmra.mxu0 %v374
        %v486 = vpop.f32.mrf.mxu0
        %v487 = vadd.f32 %v367, %v486
        %488 = vmatmul.f32.gmra.mxu0 %v377
        %v489 = vpop.f32.mrf.mxu0
        %v490 = vadd.f32 %v367, %v489
        %491 = vmatmul.f32.gmra.mxu0 %v380
        %v492 = vpop.f32.mrf.mxu0
        %v493 = vadd.f32 %v367, %v492
        %494 = vmatmul.f32.gmra.mxu0 %v383
        %v495 = vpop.f32.mrf.mxu0
        %v496 = vadd.f32 %v367, %v495
        %497 = vmatmul.f32.gmra.mxu0 %v386
        %v498 = vpop.f32.mrf.mxu0
        %v499 = vadd.f32 %v367, %v498
        %500 = vmatmul.f32.gmra.mxu0 %v389
        %v501 = vpop.f32.mrf.mxu0
        %v502 = vadd.f32 %v367, %v501
        %503 = vmatmul.f32.gmra.mxu0 %v392
        %v504 = vpop.f32.mrf.mxu0
        %v505 = vadd.f32 %v367, %v504
        %506 = vmatmul.f32.gmra.mxu0 %v395
        %v507 = vpop.f32.mrf.mxu0
        %v508 = vadd.f32 %v367, %v507
        %509 = vmatmul.f32.gmra.mxu0 %v398
        %v510 = vpop.f32.mrf.mxu0
        %v511 = vadd.f32 %v367, %v510
        %512 = vmatmul.f32.gmra.mxu0 %v401
        %v513 = vpop.f32.mrf.mxu0
        %v514 = vadd.f32 %v367, %v513
        %515 = vmatmul.f32.gmra.mxu0 %v404
        %v516 = vpop.f32.mrf.mxu0
        %v517 = vadd.f32 %v367, %v516
        %518 = vmatmul.f32.gmra.mxu0 %v407
        %v519 = vpop.f32.mrf.mxu0
        %v520 = vadd.f32 %v367, %v519
        %521 = vmatmul.f32.gmra.mxu0 %v410
        %v522 = vpop.f32.mrf.mxu0
        %v523 = vadd.f32 %v367, %v522
        %524 = vmatmul.f32.gmra.mxu0 %v413
        %v525 = vpop.f32.mrf.mxu0
        %v526 = vadd.f32 %v367, %v525
        %527 = vmatmul.f32.gmra.mxu0 %v416
        %v528 = vpop.f32.mrf.mxu0
        %v529 = vadd.f32 %v367, %v528
        %530 = vmatmul.f32.gmra.mxu0 %v419
        %v531 = vpop.f32.mrf.mxu0
        %v532 = vadd.f32 %v367, %v531
        %533 = vmatmul.f32.gmra.mxu0 %v422
        %v534 = vpop.f32.mrf.mxu0
        %v535 = vadd.f32 %v367, %v534
        %536 = vmatmul.f32.gmra.mxu0 %v425
        %v537 = vpop.f32.mrf.mxu0
        %v538 = vadd.f32 %v367, %v537
        %539 = vmatmul.f32.gmra.mxu0 %v428
        %v540 = vpop.f32.mrf.mxu0
        %v541 = vadd.f32 %v367, %v540
        %542 = vmatmul.f32.gmra.mxu0 %v431
        %v543 = vpop.f32.mrf.mxu0
        %v544 = vadd.f32 %v367, %v543
        %545 = vmatmul.f32.gmra.mxu0 %v434
        %v546 = vpop.f32.mrf.mxu0
        %v547 = vadd.f32 %v367, %v546
        %548 = vmatmul.f32.gmra.mxu0 %v437
        %v549 = vpop.f32.mrf.mxu0
        %v550 = vadd.f32 %v367, %v549
        %551 = vmatmul.f32.gmra.mxu0 %v440
        %v552 = vpop.f32.mrf.mxu0
        %v553 = vadd.f32 %v367, %v552
        %554 = vmatmul.f32.gmra.mxu0 %v443
        %v555 = vpop.f32.mrf.mxu0
        %v556 = vadd.f32 %v367, %v555
        %557 = vmatmul.f32.gmra.mxu0 %v446
        %v558 = vpop.f32.mrf.mxu0
        %v559 = vadd.f32 %v367, %v558
        %560 = vmatmul.f32.gmra.mxu0 %v449
        %v561 = vpop.f32.mrf.mxu0
        %v562 = vadd.f32 %v367, %v561
        %563 = vmatmul.f32.gmra.mxu0 %v452
        %v564 = vpop.f32.mrf.mxu0
        %v565 = vadd.f32 %v367, %v564
        %566 = vmatmul.f32.gmra.mxu0 %v455
        %v567 = vpop.f32.mrf.mxu0
        %v568 = vadd.f32 %v367, %v567
        %569 = vmatmul.f32.gmra.mxu0 %v458
        %v570 = vpop.f32.mrf.mxu0
        %v571 = vadd.f32 %v367, %v570
        %572 = vmatmul.f32.gmra.mxu0 %v461
        %v573 = vpop.f32.mrf.mxu0
        %v574 = vadd.f32 %v367, %v573
        %575 = vmatmul.f32.gmra.mxu0 %v464
        %v576 = vpop.f32.mrf.mxu0
        %v577 = vadd.f32 %v367, %v576
        %578 = vdwg.mxu0
        %v579 = vmax.f32 %v484, 0.0
        %v580 = vmax.f32 %v487, 0.0
        %v581 = vmax.f32 %v490, 0.0
        %v582 = vmax.f32 %v493, 0.0
        %v583 = vmax.f32 %v496, 0.0
        %v584 = vmax.f32 %v499, 0.0
        %v585 = vmax.f32 %v502, 0.0
        %v586 = vmax.f32 %v505, 0.0
        %v587 = vmax.f32 %v508, 0.0
        %v588 = vmax.f32 %v511, 0.0
        %v589 = vmax.f32 %v514, 0.0
        %v590 = vmax.f32 %v517, 0.0
        %v591 = vmax.f32 %v520, 0.0
        %v592 = vmax.f32 %v523, 0.0
        %v593 = vmax.f32 %v526, 0.0
        %v594 = vmax.f32 %v529, 0.0
        %v595 = vmax.f32 %v532, 0.0
        %v596 = vmax.f32 %v535, 0.0
        %v597 = vmax.f32 %v538, 0.0
        %v598 = vmax.f32 %v541, 0.0
        %v599 = vmax.f32 %v544, 0.0
        %v600 = vmax.f32 %v547, 0.0
        %v601 = vmax.f32 %v550, 0.0
        %v602 = vmax.f32 %v553, 0.0
        %v603 = vmax.f32 %v556, 0.0
        %v604 = vmax.f32 %v559, 0.0
        %v605 = vmax.f32 %v562, 0.0
        %v606 = vmax.f32 %v565, 0.0
        %v607 = vmax.f32 %v568, 0.0
        %v608 = vmax.f32 %v571, 0.0
        %v609 = vmax.f32 %v574, 0.0
        %v610 = vmax.f32 %v577, 0.0
        %v611 = vld [vmem:[%s3] sm:$0xff]
        %v612 = vld [vmem:[%s3 + $0x8] sm:$0xff]
        %v613 = vld [vmem:[%s3 + $0x10] sm:$0xff]
        %v614 = vld [vmem:[%s3 + $0x18] sm:$0xff]
        %v615 = vld [vmem:[%s3 + $0x20] sm:$0xff]
        %v616 = vld [vmem:[%s3 + $0x28] sm:$0xff]
        %v617 = vld [vmem:[%s3 + $0x30] sm:$0xff]
        %v618 = vld [vmem:[%s3 + $0x38] sm:$0xff]
        %v619 = vld [vmem:[%s3 + $0x40] sm:$0xff]
        %v620 = vld [vmem:[%s3 + $0x48] sm:$0xff]
        %v621 = vld [vmem:[%s3 + $0x50] sm:$0xff]
        %v622 = vld [vmem:[%s3 + $0x58] sm:$0xff]
        %v623 = vld [vmem:[%s3 + $0x60] sm:$0xff]
        %v624 = vld [vmem:[%s3 + $0x68] sm:$0xff]
        %v625 = vld [vmem:[%s3 + $0x70] sm:$0xff]
        %v626 = vld [vmem:[%s3 + $0x78] sm:$0xff]
        %v627 = vld [vmem:[%s4] sm:$0x1]
        %v629 = vperm.slane %v627, 0
        %631 = vmatpush.msra.mxu0 %v626
        %632 = vmatpush.msra.mxu0 %v625
        %633 = vmatpush.msra.mxu0 %v624
        %634 = vmatpush.msra.mxu0 %v623
        %635 = vmatpush.msra.mxu0 %v622
        %636 = vmatpush.msra.mxu0 %v621
        %637 = vmatpush.msra.mxu0 %v620
        %638 = vmatpush.msra.mxu0 %v619
        %639 = vmatpush.msra.mxu0 %v618
        %640 = vmatpush.msra.mxu0 %v617
        %641 = vmatpush.msra.mxu0 %v616
        %642 = vmatpush.msra.mxu0 %v615
        %643 = vmatpush.msra.mxu0 %v614
        %644 = vmatpush.msra.mxu0 %v613
        %645 = vmatpush.msra.mxu0 %v612
        %646 = vmatpush.msra.mxu0 %v611
        %647 = vmatmul.f32.gmra.mxu0 %v579
        %v648 = vpop.f32.mrf.mxu0
        %v649 = vadd.f32 %v629, %v648
        %650 = vmatmul.f32.gmra.mxu0 %v580
        %v651 = vpop.f32.mrf.mxu0
        %v652 = vadd.f32 %v629, %v651
        %653 = vmatmul.f32.gmra.mxu0 %v581
        %v654 = vpop.f32.mrf.mxu0
        %v655 = vadd.f32 %v629, %v654
        %656 = vmatmul.f32.gmra.mxu0 %v582
        %v657 = vpop.f32.mrf.mxu0
        %v658 = vadd.f32 %v629, %v657
        %659 = vmatmul.f32.gmra.mxu0 %v583
        %v660 = vpop.f32.mrf.mxu0
        %v661 = vadd.f32 %v629, %v660
        %662 = vmatmul.f32.gmra.mxu0 %v584
        %v663 = vpop.f32.mrf.mxu0
        %v664 = vadd.f32 %v629, %v663
        %665 = vmatmul.f32.gmra.mxu0 %v585
        %v666 = vpop.f32.mrf.mxu0
        %v667 = vadd.f32 %v629, %v666
        %668 = vmatmul.f32.gmra.mxu0 %v586
        %v669 = vpop.f32.mrf.mxu0
        %v670 = vadd.f32 %v629, %v669
        %671 = vmatmul.f32.gmra.mxu0 %v587
        %v672 = vpop.f32.mrf.mxu0
        %v673 = vadd.f32 %v629, %v672
        %674 = vmatmul.f32.gmra.mxu0 %v588
        %v675 = vpop.f32.mrf.mxu0
        %v676 = vadd.f32 %v629, %v675
        %677 = vmatmul.f32.gmra.mxu0 %v589
        %v678 = vpop.f32.mrf.mxu0
        %v679 = vadd.f32 %v629, %v678
        %680 = vmatmul.f32.gmra.mxu0 %v590
        %v681 = vpop.f32.mrf.mxu0
        %v682 = vadd.f32 %v629, %v681
        %683 = vmatmul.f32.gmra.mxu0 %v591
        %v684 = vpop.f32.mrf.mxu0
        %v685 = vadd.f32 %v629, %v684
        %686 = vmatmul.f32.gmra.mxu0 %v592
        %v687 = vpop.f32.mrf.mxu0
        %v688 = vadd.f32 %v629, %v687
        %689 = vmatmul.f32.gmra.mxu0 %v593
        %v690 = vpop.f32.mrf.mxu0
        %v691 = vadd.f32 %v629, %v690
        %692 = vmatmul.f32.gmra.mxu0 %v594
        %v693 = vpop.f32.mrf.mxu0
        %v694 = vadd.f32 %v629, %v693
        %695 = vmatmul.f32.gmra.mxu0 %v595
        %v696 = vpop.f32.mrf.mxu0
        %v697 = vadd.f32 %v629, %v696
        %698 = vmatmul.f32.gmra.mxu0 %v596
        %v699 = vpop.f32.mrf.mxu0
        %v700 = vadd.f32 %v629, %v699
        %701 = vmatmul.f32.gmra.mxu0 %v597
        %v702 = vpop.f32.mrf.mxu0
        %v703 = vadd.f32 %v629, %v702
        %704 = vmatmul.f32.gmra.mxu0 %v598
        %v705 = vpop.f32.mrf.mxu0
        %v706 = vadd.f32 %v629, %v705
        %707 = vmatmul.f32.gmra.mxu0 %v599
        %v708 = vpop.f32.mrf.mxu0
        %v709 = vadd.f32 %v629, %v708
        %710 = vmatmul.f32.gmra.mxu0 %v600
        %v711 = vpop.f32.mrf.mxu0
        %v712 = vadd.f32 %v629, %v711
        %713 = vmatmul.f32.gmra.mxu0 %v601
        %v714 = vpop.f32.mrf.mxu0
        %v715 = vadd.f32 %v629, %v714
        %716 = vmatmul.f32.gmra.mxu0 %v602
        %v717 = vpop.f32.mrf.mxu0
        %v718 = vadd.f32 %v629, %v717
        %719 = vmatmul.f32.gmra.mxu0 %v603
        %v720 = vpop.f32.mrf.mxu0
        %v721 = vadd.f32 %v629, %v720
        %722 = vmatmul.f32.gmra.mxu0 %v604
        %v723 = vpop.f32.mrf.mxu0
        %v724 = vadd.f32 %v629, %v723
        %725 = vmatmul.f32.gmra.mxu0 %v605
        %v726 = vpop.f32.mrf.mxu0
        %v727 = vadd.f32 %v629, %v726
        %728 = vmatmul.f32.gmra.mxu0 %v606
        %v729 = vpop.f32.mrf.mxu0
        %v730 = vadd.f32 %v629, %v729
        %731 = vmatmul.f32.gmra.mxu0 %v607
        %v732 = vpop.f32.mrf.mxu0
        %v733 = vadd.f32 %v629, %v732
        %734 = vmatmul.f32.gmra.mxu0 %v608
        %v735 = vpop.f32.mrf.mxu0
        %v736 = vadd.f32 %v629, %v735
        %737 = vmatmul.f32.gmra.mxu0 %v609
        %v738 = vpop.f32.mrf.mxu0
        %v739 = vadd.f32 %v629, %v738
        %740 = vmatmul.f32.gmra.mxu0 %v610
        %v741 = vpop.f32.mrf.mxu0
        %v742 = vadd.f32 %v629, %v741
        %743 = vdwg.mxu0
        %s744 = sld [smem:[#allocation2]]
        %vm745 = vcmp.gt.f32.partialorder %v649, 0.0
        %vm746 = vcmp.gt.f32.partialorder %v652, 0.0
        %vm747 = vcmp.gt.f32.partialorder %v655, 0.0
        %vm748 = vcmp.gt.f32.partialorder %v658, 0.0
        %vm749 = vcmp.gt.f32.partialorder %v661, 0.0
        %vm750 = vcmp.gt.f32.partialorder %v664, 0.0
        %vm751 = vcmp.gt.f32.partialorder %v667, 0.0
        %vm752 = vcmp.gt.f32.partialorder %v670, 0.0
        %vm753 = vcmp.gt.f32.partialorder %v673, 0.0
        %vm754 = vcmp.gt.f32.partialorder %v676, 0.0
        %vm755 = vcmp.gt.f32.partialorder %v679, 0.0
        %vm756 = vcmp.gt.f32.partialorder %v682, 0.0
        %vm757 = vcmp.gt.f32.partialorder %v685, 0.0
        %vm758 = vcmp.gt.f32.partialorder %v688, 0.0
        %vm759 = vcmp.gt.f32.partialorder %v691, 0.0
        %vm760 = vcmp.gt.f32.partialorder %v694, 0.0
        %vm761 = vcmp.gt.f32.partialorder %v697, 0.0
        %vm762 = vcmp.gt.f32.partialorder %v700, 0.0
        %vm763 = vcmp.gt.f32.partialorder %v703, 0.0
        %vm764 = vcmp.gt.f32.partialorder %v706, 0.0
        %vm765 = vcmp.gt.f32.partialorder %v709, 0.0
        %vm766 = vcmp.gt.f32.partialorder %v712, 0.0
        %vm767 = vcmp.gt.f32.partialorder %v715, 0.0
        %vm768 = vcmp.gt.f32.partialorder %v718, 0.0
        %vm769 = vcmp.gt.f32.partialorder %v721, 0.0
        %vm770 = vcmp.gt.f32.partialorder %v724, 0.0
        %vm771 = vcmp.gt.f32.partialorder %v727, 0.0
        %vm772 = vcmp.gt.f32.partialorder %v730, 0.0
        %vm773 = vcmp.gt.f32.partialorder %v733, 0.0
        %vm774 = vcmp.gt.f32.partialorder %v736, 0.0
        %vm775 = vcmp.gt.f32.partialorder %v739, 0.0
        %vm776 = vcmp.gt.f32.partialorder %v742, 0.0
        %v777 = vstv %s744
        %v778 = vmul.f32 %v777, %v649
        %v779 = vmul.f32 %v777, %v652
        %v780 = vmul.f32 %v777, %v655
        %v781 = vmul.f32 %v777, %v658
        %v782 = vmul.f32 %v777, %v661
        %v783 = vmul.f32 %v777, %v664
        %v784 = vmul.f32 %v777, %v667
        %v785 = vmul.f32 %v777, %v670
        %v786 = vmul.f32 %v777, %v673
        %v787 = vmul.f32 %v777, %v676
        %v788 = vmul.f32 %v777, %v679
        %v789 = vmul.f32 %v777, %v682
        %v790 = vmul.f32 %v777, %v685
        %v791 = vmul.f32 %v777, %v688
        %v792 = vmul.f32 %v777, %v691
        %v793 = vmul.f32 %v777, %v694
        %v794 = vmul.f32 %v777, %v697
        %v795 = vmul.f32 %v777, %v700
        %v796 = vmul.f32 %v777, %v703
        %v797 = vmul.f32 %v777, %v706
        %v798 = vmul.f32 %v777, %v709
        %v799 = vmul.f32 %v777, %v712
        %v800 = vmul.f32 %v777, %v715
        %v801 = vmul.f32 %v777, %v718
        %v802 = vmul.f32 %v777, %v721
        %v803 = vmul.f32 %v777, %v724
        %v804 = vmul.f32 %v777, %v727
        %v805 = vmul.f32 %v777, %v730
        %v806 = vmul.f32 %v777, %v733
        %v807 = vmul.f32 %v777, %v736
        %v808 = vmul.f32 %v777, %v739
        %v809 = vmul.f32 %v777, %v742
        %v810 = vsel %vm745, %v649, %v778
        %v811 = vsel %vm746, %v652, %v779
        %v812 = vsel %vm747, %v655, %v780
        %v813 = vsel %vm748, %v658, %v781
        %v814 = vsel %vm749, %v661, %v782
        %v815 = vsel %vm750, %v664, %v783
        %v816 = vsel %vm751, %v667, %v784
        %v817 = vsel %vm752, %v670, %v785
        %v818 = vsel %vm753, %v673, %v786
        %v819 = vsel %vm754, %v676, %v787
        %v820 = vsel %vm755, %v679, %v788
        %v821 = vsel %vm756, %v682, %v789
        %v822 = vsel %vm757, %v685, %v790
        %v823 = vsel %vm758, %v688, %v791
        %v824 = vsel %vm759, %v691, %v792
        %v825 = vsel %vm760, %v694, %v793
        %v826 = vsel %vm761, %v697, %v794
        %v827 = vsel %vm762, %v700, %v795
        %v828 = vsel %vm763, %v703, %v796
        %v829 = vsel %vm764, %v706, %v797
        %v830 = vsel %vm765, %v709, %v798
        %v831 = vsel %vm766, %v712, %v799
        %v832 = vsel %vm767, %v715, %v800
        %v833 = vsel %vm768, %v718, %v801
        %v834 = vsel %vm769, %v721, %v802
        %v835 = vsel %vm770, %v724, %v803
        %v836 = vsel %vm771, %v727, %v804
        %v837 = vsel %vm772, %v730, %v805
        %v838 = vsel %vm773, %v733, %v806
        %v839 = vsel %vm774, %v736, %v807
        %v840 = vsel %vm775, %v739, %v808
        %v841 = vsel %vm776, %v742, %v809
        %v842 = vld [vmem:[%s5] sm:$0x1]
        %s843 = sld [smem:[#allocation3]]
        %v844 = vstv %s843
        %845 = vmatpush.xpose.msra.mxu0 %v825
        %846 = vmatpush.xpose.msra.mxu0 %v824
        %847 = vmatpush.xpose.msra.mxu0 %v823
        %848 = vmatpush.xpose.msra.mxu0 %v822
        %849 = vmatpush.xpose.msra.mxu0 %v821
        %850 = vmatpush.xpose.msra.mxu0 %v820
        %851 = vmatpush.xpose.msra.mxu0 %v819
        %852 = vmatpush.xpose.msra.mxu0 %v818
        %853 = vmatpush.xpose.msra.mxu0 %v817
        %854 = vmatpush.xpose.msra.mxu0 %v816
        %855 = vmatpush.xpose.msra.mxu0 %v815
        %856 = vmatpush.xpose.msra.mxu0 %v814
        %857 = vmatpush.xpose.msra.mxu0 %v813
        %858 = vmatpush.xpose.msra.mxu0 %v812
        %859 = vmatpush.xpose.msra.mxu0 %v811
        %860 = vmatpush.xpose.msra.mxu0 %v810
        %861 = vmatmul.f32.gmra.mxu0 %v842
        %v862 = vpop.f32.mrf.mxu0
        %v863 = vadd.f32 %v844, %v862
        %864 = vdwg.mxu0
        %865 = vmatpush.xpose.msra.mxu0 %v841
        %866 = vmatpush.xpose.msra.mxu0 %v840
        %867 = vmatpush.xpose.msra.mxu0 %v839
        %868 = vmatpush.xpose.msra.mxu0 %v838
        %869 = vmatpush.xpose.msra.mxu0 %v837
        %870 = vmatpush.xpose.msra.mxu0 %v836
        %871 = vmatpush.xpose.msra.mxu0 %v835
        %872 = vmatpush.xpose.msra.mxu0 %v834
        %873 = vmatpush.xpose.msra.mxu0 %v833
        %874 = vmatpush.xpose.msra.mxu0 %v832
        %875 = vmatpush.xpose.msra.mxu0 %v831
        %876 = vmatpush.xpose.msra.mxu0 %v830
        %877 = vmatpush.xpose.msra.mxu0 %v829
        %878 = vmatpush.xpose.msra.mxu0 %v828
        %879 = vmatpush.xpose.msra.mxu0 %v827
        %880 = vmatpush.xpose.msra.mxu0 %v826
        %881 = vmatmul.f32.gmra.mxu0 %v842
        %v882 = vpop.f32.mrf.mxu0
        %v883 = vadd.f32 %v844, %v882
        %884 = vdwg.mxu0
        %v887 = vrot.slane %v883, 7
        %vm888 = vcmask 1040384
        %v889 = vsel %vm888, %v863, %v887
        %v891 = vlaneseq
        %vm892 = vcmp.ge.s32.totalorder %v891, 0
        %vm893 = vcmp.lt.s32.totalorder %v891, 256
        %vm894 = vmand %vm892, %vm893
        %895 = vst.msk [vmem:[%s313] sm:$0x3] %vm894, %v889
        %s896 = sand.u32 %s205, 1
        %s897 = scalar_lea.sflag [#allocation5], %s896
        %s898 = sand.u32 %s205, 1
        %s899 = smul.addr %s898, 2
        %s900 = scalar_lea.vmem [#allocation4], %s899
        // Predicated region
        $region53: #{tpu_custom_call.1} parent=51 // pred_check
          %p901 = pneg %p215
        $region54: #{tpu_custom_call.1} parent=51 // pred_check_branch
          %903 = sbr.rel (%p901) target = $region56
        $region55: #{tpu_custom_call.1} parent=51 // pred_region
          %s904 = smul.u32 2, %s24
          %906 = vsyncadd %s897, 0
          %s907 = scalar_lea.hbm %s8, %s904
          %s909 = sshll.u32 %s900, 4
          %s910 = int_to_ptr.vmem [resolvable:$true] %s909
          %s911 = sshll.u32 %s907, 4
          %s912 = int_to_ptr.hbm [resolvable:$true] %s911
          %914 = dma.vmem_to_hbm [thread:$0]  %s910, 32, %s912, %s897
        $region56: #{tpu_custom_call.1} parent=51 // pred_fallthru
          _
      $region52: #{tpu_custom_call.1} parent=5 // pred_fallthru
        _
      %p915 = scmp.le.s32.totalorder 2, %s19
      // Predicated region
      $region57: #{tpu_custom_call.1} parent=5 // pred_check
        %p916 = pneg %p915
      $region58: #{tpu_custom_call.1} parent=5 // pred_check_branch
        %918 = sbr.rel (%p916) target = $region60
      $region59: #{tpu_custom_call.1} parent=5 // pred_region
        %s919 = ssub.s32 %s19, 2
        // Predicated region
        $region61: #{tpu_custom_call.1} parent=59 // pred_check
          %p920 = pneg %p221
        $region62: #{tpu_custom_call.1} parent=59 // pred_check_branch
          %922 = sbr.rel (%p920) target = $region64
        $region63: #{tpu_custom_call.1} parent=59 // pred_region
          %s923 = sand.u32 %s206, 1
          %s924 = scalar_lea.sflag [#allocation5], %s923
          %s925 = sand.u32 %s206, 1
          %s926 = smul.addr %s925, 2
          %s927 = scalar_lea.vmem [#allocation4], %s926
          %929 = dma.done %s924, 32
        $region64: #{tpu_custom_call.1} parent=59 // pred_fallthru
          _
      $region60: #{tpu_custom_call.1} parent=5 // pred_fallthru
        _
    $region6: #{tpu_custom_call.1} parent=1 // loop_footer
      %s23 = sadd.s32 1, %s19
    $region7: #{tpu_custom_call.1} parent=1 // loop_footer_branch
      %18 = sbr.rel target = $region3
    $region8: #{tpu_custom_call.1} parent=1 // loop_exit
      _
    %930 = vsyncpa [#allocation5], 1
    %s931 = scalar_lea.sflag [#allocation5], 1
    %932 = vsyncpa %s931, 1

</llo_original>
